<compile_context>
chip_gen: v5e
topology: v5e:2x2
jax: 0.10.0
libtpu: 0.0.40
codegen_flags: <defaults>
</compile_context>

<pallas_src>
import jax
import jax.numpy as jnp
from jax import lax
from jax.experimental import pallas as pl
from jax.experimental.pallas import tpu as pltpu

KSIZE = 7
PAD = KSIZE // 2
_MiB = 1024 * 1024


def _vmem_capacity_bytes():
    """Per-TensorCore VMEM capacity; conservative v7x (64 MiB) on failure."""
    try:
        cap = getattr(pltpu.get_tpu_info(), "vmem_capacity_bytes", None)
        if cap:
            return int(cap)
    except Exception:
        pass
    return 64 * _MiB


def _choose_tiles(n, c, hw, itemsize, budget_bytes):
    """Pick (NB, CT, HWT) block sizes for the (N, C, H*W) channel reduction.

    Constraints (the (8,128) BlockSpec rule on the last two dims):
      * NB divides N,
      * CT divides C and (CT == C or CT % sublane_quantum == 0),
      * HWT divides H*W and (HWT == H*W or HWT % 128 == 0),
      * NB * CT * HWT * itemsize <= budget.
    Preference order:
      1. >=2 iterations on the parallel (batch x spatial) grid axes so both
         v7x TensorCores get work (prefer getting this from the batch axis),
      2. HWT == H*W, then the largest HWT (longest contiguous DMA runs),
      3. the largest block (amortises ~0.35us per-grid-step overhead),
      4. the largest CT (fewest touches of the resident accumulator).
    """
    sub_q = {4: 8, 2: 16, 1: 32}.get(itemsize, 8)
    nb_cands = [d for d in range(1, n + 1) if n % d == 0 and d <= 32]
    ct_cands = [d for d in range(1, c + 1) if c % d == 0 and (d == c or d % sub_q == 0)]
    hw_cands = [d for d in range(1, hw + 1) if hw % d == 0 and (d == hw or d % 128 == 0)]
    best_key, best = None, None
    for nb in nb_cands:
        for ct in ct_cands:
            for hwt in hw_cands:
                nbytes = nb * ct * hwt * itemsize
                if nbytes > budget_bytes:
                    continue
                par = (n // nb) * (hw // hwt)
                key = (min(par, 2), hwt == hw, hwt, nbytes, ct, par)
                if best_key is None or key > best_key:
                    best_key, best = key, (nb, ct, hwt)
    if best is None:
        # Nothing fits the budget: smallest legal block.  The vmem limit is
        # derived from the chosen block downstream, so this degrades
        # gracefully instead of tripping a fixed limit.
        best = (1, min(ct_cands), min(hw_cands))
    return best


def _choose_stage2_nb(n, h, w, out_itemsize, budget_bytes):
    """Batch tile for the conv epilogue: prefer >=2 grid steps (v7x), then the
    largest tile whose inputs + output + tap-loop intermediates fit the budget."""
    best_key, best = None, 1
    for d in range(1, n + 1):
        if n % d:
            continue
        foot = (2 * d * 2 * h * w * 4 + 2 * d * h * w * out_itemsize
                + 24 * d * (h + 2 * PAD) * (w + 2 * PAD) * 4)
        if foot > budget_bytes and d > 1:
            continue
        key = (min(n // d, 2), d)
        if best_key is None or key > best_key:
            best_key, best = key, d
    return best


# --------------------------------------------------------------------------
# Stage 1: channel-wise sum / max reduction (HBM-bound part).
# --------------------------------------------------------------------------
def _channel_reduce_kernel(x_ref, f_ref):
    # x_ref: (NB, CT, HWT) input tile; f_ref: (NB, 2, HWT) resident accumulator
    c = pl.program_id(2)                                    # reduction axis (last)
    x = x_ref[...]
    # Sum accumulates in f32; max stays in the native dtype until the store.
    part_sum = jnp.sum(x, axis=1, keepdims=True, dtype=jnp.float32)    # (NB,1,HWT)
    part_max = jnp.max(x, axis=1, keepdims=True).astype(jnp.float32)   # (NB,1,HWT)

    @pl.when(c == 0)
    def _init():
        f_ref[:, 0:1, :] = part_sum
        f_ref[:, 1:2, :] = part_max

    @pl.when(c > 0)
    def _update():
        f_ref[:, 0:1, :] = f_ref[:, 0:1, :] + part_sum
        f_ref[:, 1:2, :] = jnp.maximum(f_ref[:, 1:2, :], part_max)


# --------------------------------------------------------------------------
# Stage 2: 7x7 'same' conv over the 2-channel descriptor + sigmoid.
# --------------------------------------------------------------------------
def _conv_sigmoid_kernel(f_ref, w_ref, o_ref):
    # f_ref: (NB, 2, H, W) f32 (channel-sum, channel-max)
    # w_ref: (2*KSIZE*KSIZE,) f32 in SMEM; 1/C pre-folded into the first 49 taps
    # o_ref: (NB, H, W)
    nb, _, h, w = f_ref.shape
    f = f_ref[...]
    fp = jnp.pad(f, ((0, 0), (0, 0), (PAD, PAD), (PAD, PAD)))  # zero 'same' padding
    # Hoist the kw (lane) shifts out of the 98-tap loop: 14 shifted slabs,
    # each (nb, h+2*PAD, w), computed once.
    cols = [[fp[:, ci, :, kw:kw + w] for kw in range(KSIZE)] for ci in range(2)]
    acc = jnp.zeros((nb, h, w), jnp.float32)
    for kh in range(KSIZE):
        # Aligned multiply-adds over the full padded height for this kernel row.
        row_acc = jnp.zeros((nb, h + 2 * PAD, w), jnp.float32)
        for ci in range(2):
            for kw in range(KSIZE):
                tap = w_ref[ci * KSIZE * KSIZE + kh * KSIZE + kw]  # SMEM scalar
                row_acc = row_acc + tap * cols[ci][kw]
        # One sublane shift per kernel row (7 total) instead of 98 slices.
        acc = acc + row_acc[:, kh:kh + h, :]
    o_ref[...] = jax.nn.sigmoid(acc).astype(o_ref.dtype)


def spatial_attention(x, weight):
    """x: (N, C, H, W); weight: (1, 2, KSIZE, KSIZE), no bias -> (N, 1, H, W)."""
    n, c, h, w = x.shape
    hw = h * w
    itemsize = jnp.dtype(x.dtype).itemsize
    x_flat = x.reshape(n, c, hw)                       # lane-dense layout (free reshape)

    vmem_cap = _vmem_capacity_bytes()
    # Per-buffer budget for the big x operand: ~8 MiB on v7x (64 MiB/TC VMEM),
    # 16 MiB on v5e/v6e (128 MiB).  Default double-buffering => 2x this in VMEM.
    x_budget = min(16 * _MiB, max(4 * _MiB, vmem_cap // 8))
    nb, ct, hwt = _choose_tiles(n, c, hw, itemsize, x_budget)

    # Derive the VMEM limit from actual usage (double-buffered input + resident
    # double-buffered descriptor + slack), capped at physical capacity.
    x_block_bytes = nb * ct * hwt * itemsize
    desc_block_bytes = nb * 2 * hwt * 4
    vmem_limit_1 = int(min(vmem_cap,
                           max(2 * x_block_bytes + 2 * desc_block_bytes + 4 * _MiB,
                               24 * _MiB)))

    # ---- Stage 1: channel-wise sum / max over C ----
    feats = pl.pallas_call(
        _channel_reduce_kernel,
        out_shape=jax.ShapeDtypeStruct((n, 2, hw), jnp.float32),
        grid_spec=pltpu.PrefetchScalarGridSpec(
            num_scalar_prefetch=0,
            grid=(n // nb, hw // hwt, c // ct),        # reduction axis last
            in_specs=[pl.BlockSpec((nb, ct, hwt), lambda i, s, k: (i, k, s))],
            out_specs=pl.BlockSpec((nb, 2, hwt), lambda i, s, k: (i, 0, s)),
        ),
        compiler_params=pltpu.CompilerParams(
            dimension_semantics=("parallel", "parallel", "arbitrary"),
            vmem_limit_bytes=vmem_limit_1),
    )(x_flat)

    # ---- Stage 2: 7x7 conv + sigmoid on the tiny descriptor ----
    feats2d = feats.reshape(n, 2, h, w)                # free reshape (same HBM layout)
    # Flat taps for SMEM; fold 1/C into the avg-channel taps so stage 1 only
    # needed a raw channel sum (no divide anywhere).
    w_taps = weight.astype(jnp.float32).reshape(2, KSIZE * KSIZE)
    w_taps = w_taps * jnp.array([[1.0 / c], [1.0]], dtype=jnp.float32)
    w_taps = w_taps.reshape(-1)                        # (2*KSIZE*KSIZE,)

    nb2 = _choose_stage2_nb(n, h, w, itemsize,
                            min(8 * _MiB, max(2 * _MiB, vmem_cap // 8)))
    in2 = nb2 * 2 * h * w * 4
    out2 = nb2 * h * w * itemsize
    interm2 = 24 * nb2 * (h + 2 * PAD) * (w + 2 * PAD) * 4
    vmem_limit_2 = int(min(vmem_cap,
                           max(2 * in2 + 2 * out2 + interm2 + 4 * _MiB, 16 * _MiB)))

    out = pl.pallas_call(
        _conv_sigmoid_kernel,
        out_shape=jax.ShapeDtypeStruct((n, h, w), x.dtype),
        grid_spec=pltpu.PrefetchScalarGridSpec(
            num_scalar_prefetch=0,
            grid=(n // nb2,),
            in_specs=[
                pl.BlockSpec((nb2, 2, h, w), lambda i: (i, 0, 0, 0)),
                pl.BlockSpec(memory_space=pltpu.MemorySpace.SMEM),
            ],
            out_specs=pl.BlockSpec((nb2, h, w), lambda i: (i, 0, 0)),
        ),
        compiler_params=pltpu.CompilerParams(
            dimension_semantics=("parallel",),
            vmem_limit_bytes=vmem_limit_2),
    )(feats2d, w_taps)

    return out.reshape(n, 1, h, w)


def spatial_attention_ref(x, weight):
    """Pure-JAX reference mirroring the PyTorch forward."""
    avg = jnp.mean(x, axis=1, keepdims=True)
    mx = jnp.max(x, axis=1, keepdims=True)
    feats = jnp.concatenate([avg, mx], axis=1)         # (N, 2, H, W)
    y = lax.conv_general_dilated(
        feats, weight, window_strides=(1, 1),
        padding=[(PAD, PAD), (PAD, PAD)],
        dimension_numbers=("NCHW", "OIHW", "NCHW"))
    return jax.nn.sigmoid(y)


if __name__ == "__main__":
    key = jax.random.PRNGKey(0)
    kx, kw = jax.random.split(key)

    N, C, H, W = 2, 4, 16, 16
    x = jax.random.normal(kx, (N, C, H, W), dtype=jnp.float32)
    # deterministic synthetic conv weight (fan_in = 2*7*7), no bias
    fan_in = 2 * KSIZE * KSIZE
    weight = jax.random.uniform(
        kw, (1, 2, KSIZE, KSIZE), dtype=jnp.float32,
        minval=-1.0, maxval=1.0) / jnp.sqrt(fan_in)

    out = jax.block_until_ready(spatial_attention(x, weight))
    ref = jax.block_until_ready(spatial_attention_ref(x, weight))

    assert out.shape == (N, 1, H, W), out.shape
    assert jnp.allclose(out, ref, atol=1e-5, rtol=1e-5), \
        float(jnp.max(jnp.abs(out - ref)))

    print("KERNEL_OK")
</pallas_src>

<mosaic_0001>
module attributes {stable_mosaic.version = 11 : i64} {
  func.func @_channel_reduce_kernel(%arg0: i32, %arg1: i32, %arg2: i32, %arg3: memref<1x4x256xf32, #tpu.memory_space<vmem>>, %arg4: memref<1x2x256xf32, #tpu.memory_space<vmem>>) attributes {dimension_semantics = [#tpu.dimension_semantics<parallel>, #tpu.dimension_semantics<parallel>, #tpu.dimension_semantics<arbitrary>], iteration_bounds = array<i64: 2, 1, 1>, scalar_prefetch = 0 : i64, scratch_operands = 0 : i64, tpu.core_type = #tpu.core_type<tc>, window_params = [{transform_indices = @transform_0, window_bounds = array<i64: 1, 4, 256>}, {transform_indices = @transform_1, window_bounds = array<i64: 1, 2, 256>}]} {
    %c0 = arith.constant 0 : index
    %c0_0 = arith.constant 0 : index
    %c0_1 = arith.constant 0 : index
    %0 = vector.load %arg3[%c0, %c0_0, %c0_1] : memref<1x4x256xf32, #tpu.memory_space<vmem>>, vector<1x4x256xf32>
    %cst = arith.constant dense<0.000000e+00> : vector<1x256xf32>
    %1 = vector.multi_reduction <add>, %0, %cst [1] : vector<1x4x256xf32> to vector<1x256xf32>
    %2 = vector.shape_cast %1 : vector<1x256xf32> to vector<1x1x256xf32>
    %cst_2 = arith.constant dense<0xFF800000> : vector<1x256xf32>
    %3 = vector.multi_reduction <maximumf>, %0, %cst_2 [1] : vector<1x4x256xf32> to vector<1x256xf32>
    %4 = vector.shape_cast %3 : vector<1x256xf32> to vector<1x1x256xf32>
    %c0_i32 = arith.constant 0 : i32
    %5 = arith.cmpi eq, %arg2, %c0_i32 : i32
    %6 = arith.extui %5 : i1 to i32
    %c0_i32_3 = arith.constant 0 : i32
    %7 = arith.cmpi ne, %6, %c0_i32_3 : i32
    scf.if %7 {
      %c0_6 = arith.constant 0 : index
      %c0_7 = arith.constant 0 : index
      %c0_8 = arith.constant 0 : index
      %11 = vector.load %arg4[%c0_6, %c0_7, %c0_8] : memref<1x2x256xf32, #tpu.memory_space<vmem>>, vector<1x1x256xf32>
      tpu.vector_store %arg4[%c0_6, %c0_7, %c0_8], %2 {strides = array<i32>} : memref<1x2x256xf32, #tpu.memory_space<vmem>>, vector<1x1x256xf32>,
      %c0_9 = arith.constant 0 : index
      %c1 = arith.constant 1 : index
      %c0_10 = arith.constant 0 : index
      %12 = vector.load %arg4[%c0_9, %c1, %c0_10] : memref<1x2x256xf32, #tpu.memory_space<vmem>>, vector<1x1x256xf32>
      tpu.vector_store %arg4[%c0_9, %c1, %c0_10], %4 {strides = array<i32>} : memref<1x2x256xf32, #tpu.memory_space<vmem>>, vector<1x1x256xf32>,
    } else {
    }
    %c0_i32_4 = arith.constant 0 : i32
    %8 = arith.cmpi sgt, %arg2, %c0_i32_4 : i32
    %9 = arith.extui %8 : i1 to i32
    %c0_i32_5 = arith.constant 0 : i32
    %10 = arith.cmpi ne, %9, %c0_i32_5 : i32
    scf.if %10 {
      %c0_6 = arith.constant 0 : index
      %c0_7 = arith.constant 0 : index
      %c0_8 = arith.constant 0 : index
      %11 = vector.load %arg4[%c0_6, %c0_7, %c0_8] : memref<1x2x256xf32, #tpu.memory_space<vmem>>, vector<1x1x256xf32>
      %12 = arith.addf %11, %2 : vector<1x1x256xf32>
      %c0_9 = arith.constant 0 : index
      %c0_10 = arith.constant 0 : index
      %c0_11 = arith.constant 0 : index
      %13 = vector.load %arg4[%c0_9, %c0_10, %c0_11] : memref<1x2x256xf32, #tpu.memory_space<vmem>>, vector<1x1x256xf32>
      tpu.vector_store %arg4[%c0_9, %c0_10, %c0_11], %12 {strides = array<i32>} : memref<1x2x256xf32, #tpu.memory_space<vmem>>, vector<1x1x256xf32>,
      %c0_12 = arith.constant 0 : index
      %c1 = arith.constant 1 : index
      %c0_13 = arith.constant 0 : index
      %14 = vector.load %arg4[%c0_12, %c1, %c0_13] : memref<1x2x256xf32, #tpu.memory_space<vmem>>, vector<1x1x256xf32>
      %15 = arith.maximumf %14, %4 : vector<1x1x256xf32>
      %c0_14 = arith.constant 0 : index
      %c1_15 = arith.constant 1 : index
      %c0_16 = arith.constant 0 : index
      %16 = vector.load %arg4[%c0_14, %c1_15, %c0_16] : memref<1x2x256xf32, #tpu.memory_space<vmem>>, vector<1x1x256xf32>
      tpu.vector_store %arg4[%c0_14, %c1_15, %c0_16], %15 {strides = array<i32>} : memref<1x2x256xf32, #tpu.memory_space<vmem>>, vector<1x1x256xf32>,
    } else {
    }
    return
  }
  func.func @transform_0(%arg0: i32, %arg1: i32, %arg2: i32) -> (i32, i32, i32) {
    %c0_i32 = arith.constant 0 : i32
    return %arg0, %arg2, %arg1 : i32, i32, i32
  }
  func.func @transform_1(%arg0: i32, %arg1: i32, %arg2: i32) -> (i32, i32, i32) {
    %c0_i32 = arith.constant 0 : i32
    %c0_i32_0 = arith.constant 0 : i32
    return %arg0, %c0_i32, %arg1 : i32, i32, i32
  }
}

</mosaic_0001>

<llo_original>
// kernel: tpu_custom_call.1
$region0: #{tpu_custom_call.1}
  #allocation0 [shape = 'u32[]', space=smem, size = 0x4, offset = 0x4, fixed_abs, tag = 'smem constant byte address 0x4 - core index']
  #allocation1 [shape = 'u32[72,128]{1,0:T(1,128)}', space=vmem, size = 0x9000, scoped, tag = 'internal scratch']
  %s0 = inlined_call_operand.hbm [shape: f32[2,4,256], index: 0, kind: input, shape index: {}]
  %s1 = inlined_call_operand.hbm [shape: f32[2,2,256], index: 1, kind: output, shape index: {}]
  %s2 = sld [smem:[#allocation0]]
  $region49: #{tpu_custom_call.1} parent=0
    _
  %s4 = ssub.s32 1, %s2
  %s5 = scalar_select 0, %s4, %s2
  $region1: #{tpu_custom_call.1} parent=0
    #allocation2 [shape = 'u8[8192]{0}', space=vmem, size = 0x2000, scoped, tag = 'input window, operand 0']
    #allocation3 [shape = 's32[2]{0}', space=sflag, size = 0x8, scoped, tag = 'scoped memory for tpu_custom_call.1']
    #allocation4 [shape = 's32[2]{0}', space=sflag, size = 0x8, scoped, tag = 'scoped memory for tpu_custom_call.1']
    #allocation5 [shape = 'u8[4096]{0}', space=vmem, size = 0x1000, scoped, tag = 'output window, operand 0']
    %6 = vsyncpa [#allocation3], 0
    %s7 = scalar_lea.sflag [#allocation3], 1
    %8 = vsyncpa %s7, 0
    %9 = vsyncpa [#allocation4], 0
    %s10 = scalar_lea.sflag [#allocation4], 1
    %11 = vsyncpa %s10, 0
    loop: start=0, step=1, limit=4
    $region2: #{tpu_custom_call.1} parent=1 // loop_pre_header
      _
    $region3: #{tpu_custom_call.1} parent=1 // loop_header
      %s13 = sphi 0, %s17
      %p14 = scmp.ge.s32.totalorder %s13, 4
      %s20 = sphi 0, %s39
      %s21 = sphi 0, %s35
      %s22 = sphi 0, %s31
      %s23 = sphi 0, %s20
      %s24 = sphi 0, %s21
      %s25 = sphi 0, %s22
      %s26 = sphi 0, %s23
      %s27 = sphi 0, %s24
      %s28 = sphi 0, %s25
      %s46 = sphi 0, %s48
      %s49 = sphi 0, %s46
      %s50 = sphi 0, %s49
      %s66 = sphi 0, %s50
      %s74 = sphi 0, %s76
      %s77 = sphi 0, %s74
      %s78 = sphi 0, %s77
      %s94 = sphi 0, %s78
    $region4: #{tpu_custom_call.1} parent=1 // loop_header_branch
      %16 = sbr.rel (%p14) target = $region8
    $region5: #{tpu_custom_call.1} parent=1 // loop_body
      %s18 = ssub.s32 %s13, 1
      %s19 = ssub.s32 %s13, 2
      %s29 = sadd.s32 1, %s22
      %p30 = scmp.ge.s32.totalorder %s29, 1
      %s31 = scalar_select %p30, 0, %s29
      %s32 = sadd.s32 1, %s21
      %s33 = scalar_select %p30, %s32, %s21
      %p34 = scmp.ge.s32.totalorder %s33, 1
      %s35 = scalar_select %p34, 0, %s33
      %s36 = sadd.s32 1, %s20
      %s37 = scalar_select %p34, %s36, %s20
      %p38 = scmp.ge.s32.totalorder %s37, 2
      %s39 = scalar_select %p38, 0, %s37
      %s40 = ssub.s32 %s20, %s39
      %s41 = ssub.s32 %s22, %s31
      %s42 = sor.u32 %s40, %s41
      %s43 = ssub.s32 %s21, %s35
      %s44 = sor.u32 %s42, %s43
      %p45 = scmp.eq.s32.totalorder %s44, 0
      %s47 = sadd.s32 %s46, 1
      %s48 = scalar_select %p45, %s46, %s47
      %p51 = pneg %p45
      %p52 = scmp.eq.s32.totalorder %s13, 1
      %p53 = por %p51, %p52
      %p54 = scmp.ne.s32.totalorder %s46, %s49
      %p55 = scmp.eq.s32.totalorder %s13, 0
      %p56 = por %p54, %p55
      %p57 = scmp.ne.s32.totalorder %s46, %s49
      %p58 = scmp.eq.s32.totalorder %s18, 1
      %p59 = por %p57, %p58
      %p60 = scmp.ne.s32.totalorder %s49, %s50
      %p61 = scmp.eq.s32.totalorder %s18, 0
      %p62 = por %p60, %p61
      %p63 = scmp.ne.s32.totalorder %s49, %s50
      %p64 = scmp.eq.s32.totalorder %s19, 1
      %p65 = por %p63, %p64
      %p67 = scmp.ne.s32.totalorder %s50, %s66
      %p68 = scmp.eq.s32.totalorder %s19, 0
      %p69 = por %p67, %p68
      %s70 = ssub.s32 %s20, %s39
      %s71 = ssub.s32 %s21, %s35
      %s72 = sor.u32 %s70, %s71
      %p73 = scmp.eq.s32.totalorder %s72, 0
      %s75 = sadd.s32 %s74, 1
      %s76 = scalar_select %p73, %s74, %s75
      %p79 = pneg %p73
      %p80 = scmp.eq.s32.totalorder %s13, 1
      %p81 = por %p79, %p80
      %p82 = scmp.ne.s32.totalorder %s74, %s77
      %p83 = scmp.eq.s32.totalorder %s13, 0
      %p84 = por %p82, %p83
      %p85 = scmp.ne.s32.totalorder %s74, %s77
      %p86 = scmp.eq.s32.totalorder %s18, 1
      %p87 = por %p85, %p86
      %p88 = scmp.ne.s32.totalorder %s77, %s78
      %p89 = scmp.eq.s32.totalorder %s18, 0
      %p90 = por %p88, %p89
      %p91 = scmp.ne.s32.totalorder %s77, %s78
      %p92 = scmp.eq.s32.totalorder %s19, 1
      %p93 = por %p91, %p92
      %p95 = scmp.ne.s32.totalorder %s78, %s94
      %p96 = scmp.eq.s32.totalorder %s19, 0
      %p97 = por %p95, %p96
      %p98 = scmp.le.s32.totalorder 1, %s13
      %p99 = scmp.lt.s32.totalorder %s13, 3
      %p100 = pnand %p98, %p99
      %p101 = pneg %p100
      // Predicated region
      $region9: #{tpu_custom_call.1} parent=5 // pred_check
        _
      $region10: #{tpu_custom_call.1} parent=5 // pred_check_branch
        %103 = sbr.rel (%p100) target = $region12
      $region11: #{tpu_custom_call.1} parent=5 // pred_region
        %s104 = ssub.s32 %s13, 1
      $region12: #{tpu_custom_call.1} parent=5 // pred_fallthru
        _
      %p105 = scmp.lt.s32.totalorder %s13, 2
      // Predicated region
      $region13: #{tpu_custom_call.1} parent=5 // pred_check
        %p106 = pneg %p105
      $region14: #{tpu_custom_call.1} parent=5 // pred_check_branch
        %108 = sbr.rel (%p106) target = $region16
      $region15: #{tpu_custom_call.1} parent=5 // pred_region
        // Predicated region
        $region17: #{tpu_custom_call.1} parent=15 // pred_check
          %p109 = pneg %p56
        $region18: #{tpu_custom_call.1} parent=15 // pred_check_branch
          %111 = sbr.rel (%p109) target = $region20
        $region19: #{tpu_custom_call.1} parent=15 // pred_region
          %s112 = sand.u32 %s46, 1
          %s113 = scalar_lea.sflag [#allocation3], %s112
          %s114 = sand.u32 %s46, 1
          %s115 = smul.addr %s114, 8
          %s116 = scalar_lea.vmem [#allocation2], %s115
          %s117 = smul.u32 2, %s21
          %119 = vsyncadd %s113, 0
          %s120 = smul.addr %s22, 2
          %s121 = sadd.s32 %s117, %s120
          %s122 = smul.addr %s20, 2
          %s123 = sadd.s32 %s121, %s122
          %s124 = smul.addr %s123, 4
          %s125 = scalar_lea.hbm %s0, %s124
          %s127 = sshll.u32 %s125, 4
          %s128 = int_to_ptr.hbm [resolvable:$true] %s127
          %s129 = sshll.u32 %s116, 4
          %s130 = int_to_ptr.vmem [resolvable:$true] %s129
          %132 = dma.hbm_to_vmem [thread:$0]  %s128, 128, %s130, %s113
        $region20: #{tpu_custom_call.1} parent=15 // pred_fallthru
          _
      $region16: #{tpu_custom_call.1} parent=5 // pred_fallthru
        _
      %p133 = scmp.le.s32.totalorder 1, %s13
      %p134 = scmp.lt.s32.totalorder %s13, 3
      %p135 = pnand %p133, %p134
      %p136 = pneg %p135
      // Predicated region
      $region21: #{tpu_custom_call.1} parent=5 // pred_check
        _
      $region22: #{tpu_custom_call.1} parent=5 // pred_check_branch
        %138 = sbr.rel (%p135) target = $region24
      $region23: #{tpu_custom_call.1} parent=5 // pred_region
        %s139 = ssub.s32 %s13, 1
        %s140 = sand.u32 %s49, 1
        %s141 = scalar_lea.sflag [#allocation3], %s140
        %s142 = sand.u32 %s49, 1
        %s143 = smul.addr %s142, 8
        %s144 = scalar_lea.vmem [#allocation2], %s143
        // Predicated region
        $region25: #{tpu_custom_call.1} parent=23 // pred_check
          %p145 = pneg %p62
        $region26: #{tpu_custom_call.1} parent=23 // pred_check_branch
          %147 = sbr.rel (%p145) target = $region28
        $region27: #{tpu_custom_call.1} parent=23 // pred_region
          %149 = dma.done %s141, 128
        $region28: #{tpu_custom_call.1} parent=23 // pred_fallthru
          _
        %s150 = sand.u32 %s49, 1
        %s151 = scalar_lea.sflag [#allocation3], %s150
        %s152 = sand.u32 %s49, 1
        %s153 = smul.addr %s152, 8
        %s154 = scalar_lea.vmem [#allocation2], %s153
        %p155 = pneg %p62
        %p156 = pneg %p59
        %p157 = pneg %p90
        %p158 = pneg %p87
        %s159 = sand.u32 %s77, 1
        %s160 = scalar_lea.sflag [#allocation4], %s159
        %s161 = sand.u32 %s77, 1
        %s162 = smul.addr %s161, 4
        %s163 = scalar_lea.vmem [#allocation5], %s162
        %s164 = smul.u32 2, %s24
        %s165 = smul.u32 2, %s24
        %v166 = vld [vmem:[%s144] sm:$0xff]
        %168 = vst [vmem:[#allocation1] ss:$2 sm:$0xff] %v166
        %v169 = vld.sshfl [vmem:[#allocation1] sm:$0xff pattern:$0x75316420]
        %v170 = vld.sshfl [vmem:[#allocation1 + $0x8] sm:$0xff pattern:$0x75316420]
        %vm173 = vcmask 1043456
        %v174 = vsel %vm173, %v169, 0.0
        %v175 = vrot.slane %v174, 4
        %v176 = vadd.f32 %v174, %v175
        %v177 = vrot.slane %v176, 2
        %v178 = vadd.f32 %v176, %v177
        %v179 = vrot.slane %v178, 1
        %v180 = vadd.f32 %v178, %v179
        %v181 = vsel %vm173, %v170, 0.0
        %v182 = vrot.slane %v181, 4
        %v183 = vadd.f32 %v181, %v182
        %v184 = vrot.slane %v183, 2
        %v185 = vadd.f32 %v183, %v184
        %v186 = vrot.slane %v185, 1
        %v187 = vadd.f32 %v185, %v186
        %188 = vst [vmem:[#allocation1] ss:$2 sm:$0xff] %v166
        %v189 = vld.sshfl [vmem:[#allocation1] sm:$0xff pattern:$0x75316420]
        %v190 = vld.sshfl [vmem:[#allocation1 + $0x8] sm:$0xff pattern:$0x75316420]
        %v193 = vsel %vm173, %v189, -inf
        %v194 = vrot.slane %v193, 4
        %v195 = vmax.f32 %v193, %v194
        %v196 = vrot.slane %v195, 2
        %v197 = vmax.f32 %v195, %v196
        %v198 = vrot.slane %v197, 1
        %v199 = vmax.f32 %v197, %v198
        %v200 = vsel %vm173, %v190, -inf
        %v201 = vrot.slane %v200, 4
        %v202 = vmax.f32 %v200, %v201
        %v203 = vrot.slane %v202, 2
        %v204 = vmax.f32 %v202, %v203
        %v205 = vrot.slane %v204, 1
        %v206 = vmax.f32 %v204, %v205
        %p207 = scmp.eq.s32.totalorder %s25, 0
        // Predicated region
        $region29: #{tpu_custom_call.1} parent=23 // pred_check
          %p208 = pneg %p207
        $region30: #{tpu_custom_call.1} parent=23 // pred_check_branch
          %210 = sbr.rel (%p208) target = $region32
        $region31: #{tpu_custom_call.1} parent=23 // pred_region
          %v213 = vrot.slane %v187, 7
          %vm214 = vcmask 1040384
          %v215 = vsel %vm214, %v180, %v213
          %v217 = vlaneseq
          %vm218 = vcmp.ge.s32.totalorder %v217, 0
          %vm219 = vcmp.lt.s32.totalorder %v217, 256
          %vm220 = vmand %vm218, %vm219
          %221 = vst.msk [vmem:[%s163] ss:$2 sm:$0x3] %vm220, %v215
          %v224 = vrot.slane %v206, 7
          %v225 = vsel %vm214, %v199, %v224
          %s227 = scalar_lea.vmem %s163, 1 [#allocation5]
          %228 = vst.msk [vmem:[%s227] ss:$2 sm:$0x3] %vm220, %v225
        $region32: #{tpu_custom_call.1} parent=23 // pred_fallthru
          _
        %p229 = scmp.gt.s32.totalorder %s25, 0
        // Predicated region
        $region33: #{tpu_custom_call.1} parent=23 // pred_check
          %p230 = pneg %p229
        $region34: #{tpu_custom_call.1} parent=23 // pred_check_branch
          %232 = sbr.rel (%p230) target = $region36
        $region35: #{tpu_custom_call.1} parent=23 // pred_region
          %v233 = vld [vmem:[%s163] ss:$2 sm:$0x3]
          %v236 = vrot.slane %v187, 7
          %vm237 = vcmask 1040384
          %v238 = vsel %vm237, %v180, %v236
          %v240 = vadd.f32 %v233, %v238
          %v241 = vlaneseq
          %vm242 = vcmp.ge.s32.totalorder %v241, 0
          %vm243 = vcmp.lt.s32.totalorder %v241, 256
          %vm244 = vmand %vm242, %vm243
          %245 = vst.msk [vmem:[%s163] ss:$2 sm:$0x3] %vm244, %v240
          %s246 = scalar_lea.vmem %s163, 1 [#allocation5]
          %v247 = vld [vmem:[%s246] ss:$2 sm:$0x3]
          %v250 = vrot.slane %v206, 7
          %v251 = vsel %vm237, %v199, %v250
          %v253 = vmax.f32 %v247, %v251
          %254 = vst.msk [vmem:[%s246] ss:$2 sm:$0x3] %vm244, %v253
        $region36: #{tpu_custom_call.1} parent=23 // pred_fallthru
          _
        %s255 = sand.u32 %s77, 1
        %s256 = scalar_lea.sflag [#allocation4], %s255
        %s257 = sand.u32 %s77, 1
        %s258 = smul.addr %s257, 4
        %s259 = scalar_lea.vmem [#allocation5], %s258
        // Predicated region
        $region37: #{tpu_custom_call.1} parent=23 // pred_check
          %p260 = pneg %p87
        $region38: #{tpu_custom_call.1} parent=23 // pred_check_branch
          %262 = sbr.rel (%p260) target = $region40
        $region39: #{tpu_custom_call.1} parent=23 // pred_region
          %s263 = smul.u32 2, %s24
          %265 = vsyncadd %s256, 0
          %s266 = smul.addr %s23, 2
          %s267 = sadd.s32 %s263, %s266
          %s268 = smul.addr %s267, 2
          %s269 = scalar_lea.hbm %s1, %s268
          %s271 = sshll.u32 %s259, 4
          %s272 = int_to_ptr.vmem [resolvable:$true] %s271
          %s273 = sshll.u32 %s269, 4
          %s274 = int_to_ptr.hbm [resolvable:$true] %s273
          %276 = dma.vmem_to_hbm [thread:$0]  %s272, 64, %s274, %s256
        $region40: #{tpu_custom_call.1} parent=23 // pred_fallthru
          _
      $region24: #{tpu_custom_call.1} parent=5 // pred_fallthru
        _
      %p277 = scmp.le.s32.totalorder 2, %s13
      // Predicated region
      $region41: #{tpu_custom_call.1} parent=5 // pred_check
        %p278 = pneg %p277
      $region42: #{tpu_custom_call.1} parent=5 // pred_check_branch
        %280 = sbr.rel (%p278) target = $region44
      $region43: #{tpu_custom_call.1} parent=5 // pred_region
        %s281 = ssub.s32 %s13, 2
        // Predicated region
        $region45: #{tpu_custom_call.1} parent=43 // pred_check
          %p282 = pneg %p93
        $region46: #{tpu_custom_call.1} parent=43 // pred_check_branch
          %284 = sbr.rel (%p282) target = $region48
        $region47: #{tpu_custom_call.1} parent=43 // pred_region
          %s285 = sand.u32 %s78, 1
          %s286 = scalar_lea.sflag [#allocation4], %s285
          %s287 = sand.u32 %s78, 1
          %s288 = smul.addr %s287, 4
          %s289 = scalar_lea.vmem [#allocation5], %s288
          %291 = dma.done %s286, 64
        $region48: #{tpu_custom_call.1} parent=43 // pred_fallthru
          _
      $region44: #{tpu_custom_call.1} parent=5 // pred_fallthru
        _
    $region6: #{tpu_custom_call.1} parent=1 // loop_footer
      %s17 = sadd.s32 1, %s13
    $region7: #{tpu_custom_call.1} parent=1 // loop_footer_branch
      %12 = sbr.rel target = $region3
    $region8: #{tpu_custom_call.1} parent=1 // loop_exit
      _
    %292 = vsyncpa [#allocation3], 1
    %s293 = scalar_lea.sflag [#allocation3], 1
    %294 = vsyncpa %s293, 1
    %295 = vsyncpa [#allocation4], 1
    %s296 = scalar_lea.sflag [#allocation4], 1
    %297 = vsyncpa %s296, 1

</llo_original>
